<compile_context>
chip_gen: v7x
topology: tpu7x:2x2x1
jax: 0.10.0
libtpu: 0.0.40
codegen_flags: <defaults>
</compile_context>

<pallas_src>
import jax
import jax.numpy as jnp
from jax.experimental import pallas as pl
from jax.experimental.pallas import tpu as pltpu


H_STEP = 0.001   # Euler step size from the module (h=0.001)
LANES = 128      # TPU lane width; all feature dims are zero-padded to this


def _make_kernel(nlayers):
    """Kernel closure over static sizes.

    Ref order: aconst_ref (SMEM, (nlayers, 4): [a, 1/a, a-1/a, 1-a^2]),
               z_ref (tile_b, 128) f32, w_ref ((nlayers+1)*128, 128) bf16,
               b_ref (nbias_rows, 128) f32, o_ref (tile_b, 128) f32,
               act_ref scratch (tile_b, 128) bf16.
    """

    def kernel(aconst_ref, z_ref, w_ref, b_ref, o_ref, act_ref):
        zin = z_ref[...]                                     # (tile_b, 128) f32
        x = zin.astype(jnp.bfloat16)                         # bf16 MXU operand

        for k in range(nlayers):
            w = w_ref[k * LANES:(k + 1) * LANES, :]          # (128, 128) bf16
            # Pre-activation stays in vregs (no scratch round trip).
            pre = (jnp.dot(x, w, preferred_element_type=jnp.float32)
                   + b_ref[k:k + 1, :])                      # (tile_b, 128) f32
            a = aconst_ref[k, 0]
            inv_a = aconst_ref[k, 1]
            c_pos = aconst_ref[k, 2]                         # a - 1/a
            c_neg = aconst_ref[k, 3]                         # 1 - a^2

            @pl.when(a > 0.0)
            def _():
                act_ref[...] = (jnp.exp(a * pre) * inv_a + c_pos).astype(jnp.bfloat16)

            @pl.when(a < 0.0)
            def _():
                # 1e-30 clamp keeps padded lanes / out-of-domain inputs finite
                # (matches the JAX reference; PyTorch would produce NaN/-inf).
                act_ref[...] = (-jnp.log(jnp.maximum(c_neg - a * pre, 1e-30))
                                * inv_a).astype(jnp.bfloat16)

            @pl.when(a == 0.0)
            def _():
                act_ref[...] = pre.astype(jnp.bfloat16)      # identity

            x = act_ref[...]                                 # single bf16 load

        # Output layer: W/b pre-scaled by h on the host, so dy == h*MLP(z).
        # The bias row is stream-dependent: row nlayers  -> h*b_last (yn stream),
        #                                   row nlayers+1-> h*b_last + self.bias.
        w_last = w_ref[nlayers * LANES:(nlayers + 1) * LANES, :]
        b_last = b_ref[pl.ds(nlayers + pl.program_id(0), 1), :]
        dy = jnp.dot(x, w_last, preferred_element_type=jnp.float32) + b_last

        # Lane-dense store: lanes >= ny hold zin's u/d/padding (dy is 0 there);
        # the wrapper slices [:, :ny].
        o_ref[...] = zin + dy

    return kernel


def _pack_params(Ws, bs, ybias, h):
    """Pack MLP parameters into a bf16 weight slab + a small f32 bias slab.

    Weight slab: nlayers+1 zero-padded 128x128 bf16 blocks (last pre-scaled by h).
    Bias slab (f32, 8-row aligned): rows [0, nlayers) hidden biases,
      row nlayers    = h*b_last                (yn stream),
      row nlayers+1  = h*b_last + module bias  (ystep stream).
    """
    L = len(Ws) - 1
    wblocks = []
    for k, W in enumerate(Ws):
        Wp = jnp.zeros((LANES, LANES), jnp.float32)
        Wp = Wp.at[:W.shape[0], :W.shape[1]].set(W.astype(jnp.float32))
        if k == L:
            Wp = Wp * h
        wblocks.append(Wp)
    wslab = jnp.concatenate(wblocks, axis=0).astype(jnp.bfloat16)

    nbias_rows = ((L + 2 + 7) // 8) * 8
    brows = jnp.zeros((nbias_rows, LANES), jnp.float32)
    for k in range(L):
        brows = brows.at[k, :bs[k].shape[0]].set(bs[k].astype(jnp.float32))
    b_last = jnp.zeros((LANES,), jnp.float32)
    b_last = b_last.at[:bs[L].shape[0]].set(bs[L].astype(jnp.float32) * h)
    yb = jnp.zeros((LANES,), jnp.float32)
    yb = yb.at[:ybias.shape[0]].set(ybias.astype(jnp.float32))
    brows = brows.at[L].set(b_last)           # stream 0 (yn)
    brows = brows.at[L + 1].set(b_last + yb)  # stream 1 (ystep) includes module bias
    return wslab, brows


def _act_consts(alphas):
    """Host-precomputed per-layer activation constants: [a, 1/a, a-1/a, 1-a^2]."""
    a = jnp.asarray(alphas, dtype=jnp.float32)
    safe = jnp.where(a == 0.0, 1.0, a)
    inv = 1.0 / safe
    return jnp.stack([a, inv, a - inv, 1.0 - a * a], axis=-1)   # (nlayers, 4)


def euler_integrator(yn, ystep, u, d, Ws, bs, alphas, bias, h=H_STEP, tile_b=None):
    """Pallas wrapper. Ws[k]: (in_k, out_k), bs[k]: (out_k,), alphas: (nlayers,),
    bias: (ny,). Returns (yn_next, ystep_next + bias)."""
    B, ny = yn.shape
    nlayers = len(Ws) - 1
    insize = ny + u.shape[-1] + d.shape[-1]
    assert insize <= LANES and max(W.shape[1] for W in Ws) <= LANES
    # TODO(synk): widths > 128 would need a lane-blocked parameter slab.

    # Two integrator streams on a leading stream axis; both use torch.cat([u, d]).
    ud = jnp.concatenate([u, d], axis=-1)
    zs = jnp.stack([jnp.concatenate([yn, ud], axis=-1),
                    jnp.concatenate([ystep, ud], axis=-1)], axis=0).astype(jnp.float32)
    z = jnp.pad(zs, ((0, 0), (0, 0), (0, LANES - insize)))           # (2, B, 128)
    # TODO(synk): for production-scale B on v5e, pass the unpadded (2, B, insize)
    # slab and zero-pad to 128 lanes inside the kernel to cut input HBM bytes ~8x.

    wslab, bslab = _pack_params(Ws, bs, bias, h)
    aconst = _act_consts(alphas)

    if tile_b is None:
        tile_b = B if B <= 1024 else 1024    # large tiles amortize grid-step overhead
    assert tile_b == B or tile_b % 8 == 0
    nb = pl.cdiv(B, tile_b)

    kernel = _make_kernel(nlayers)

    out = pl.pallas_call(
        kernel,
        out_shape=jax.ShapeDtypeStruct((2, B, LANES), jnp.float32),
        grid_spec=pltpu.PrefetchScalarGridSpec(
            num_scalar_prefetch=1,                                   # aconst -> SMEM
            grid=(2, nb),                                            # (stream, batch-tile)
            in_specs=[
                pl.BlockSpec((None, tile_b, LANES), lambda s, j, _a: (s, j, 0)),  # z
                pl.BlockSpec(wslab.shape, lambda s, j, _a: (0, 0)),  # bf16 weight slab
                pl.BlockSpec(bslab.shape, lambda s, j, _a: (0, 0)),  # f32 bias slab
            ],
            out_specs=pl.BlockSpec((None, tile_b, LANES), lambda s, j, _a: (s, j, 0)),
            scratch_shapes=[pltpu.VMEM((tile_b, LANES), jnp.bfloat16)],
        ),
        compiler_params=pltpu.CompilerParams(
            dimension_semantics=("parallel", "parallel")),
    )(aconst, z, wslab, bslab)

    return out[0, :, :ny], out[1, :, :ny]


def euler_integrator_ref(yn, ystep, u, d, Ws, bs, alphas, bias, h=H_STEP):
    """Pure-JAX f32 reference (same semantics, no folding/stacking/bf16)."""
    def soft_exp(x, a):
        safe_a = jnp.where(a == 0.0, 1.0, a)
        pos = (jnp.exp(a * x) - 1.0) / safe_a + a
        neg = -jnp.log(jnp.maximum(1.0 - a * (x + a), 1e-30)) / safe_a
        return jnp.where(a == 0.0, x, jnp.where(a > 0.0, pos, neg))

    def mlp(zz):
        x = zz
        n = len(Ws) - 1
        for k in range(n):
            x = soft_exp(x @ Ws[k] + bs[k], alphas[k])
        return x @ Ws[n] + bs[n]

    ud = jnp.concatenate([u, d], axis=-1)
    out1 = yn + h * mlp(jnp.concatenate([yn, ud], axis=-1))
    out2 = ystep + h * mlp(jnp.concatenate([ystep, ud], axis=-1)) + bias
    return out1, out2


if __name__ == "__main__":
    # Small shapes consistent with the module's forward.
    B, ny, nu, nd = 8, 8, 4, 3
    hsize, nlayers = 32, 2
    insize = ny + nu + nd

    key = jax.random.PRNGKey(0)
    ks = jax.random.split(key, 16)

    yn = jax.random.normal(ks[0], (B, ny), dtype=jnp.float32)
    ystep = jax.random.normal(ks[1], (B, ny), dtype=jnp.float32)
    u = jax.random.normal(ks[2], (B, nu), dtype=jnp.float32)
    d = jax.random.normal(ks[3], (B, nd), dtype=jnp.float32)

    # Deterministic MLP init (nlayers hidden layers + output layer).
    sizes = [insize] + [hsize] * nlayers + [ny]
    Ws, bs = [], []
    for i in range(len(sizes) - 1):
        fan_in = sizes[i]
        Ws.append(jax.random.normal(ks[4 + 2 * i], (sizes[i], sizes[i + 1]),
                                    dtype=jnp.float32) / jnp.sqrt(float(fan_in)))
        bs.append(jax.random.normal(ks[5 + 2 * i], (sizes[i + 1],),
                                    dtype=jnp.float32) * 0.1)
    # SoftExponential alphas (PyTorch default init is 0.0 -> identity; nonzero values
    # exercise both analytic branches while staying well inside the log domain).
    alphas = jnp.array([0.3, -0.1], dtype=jnp.float32)
    bias = jax.random.normal(ks[12], (ny,), dtype=jnp.float32)   # self.bias

    out = euler_integrator(yn, ystep, u, d, Ws, bs, alphas, bias)
    out = jax.block_until_ready(out)

    ref = euler_integrator_ref(yn, ystep, u, d, Ws, bs, alphas, bias)
    # bf16 matmul operands with f32 accumulate; h=1e-3 scaling keeps the Euler
    # residual error ~1e-4, so a few-e-3 tolerance is comfortable.
    for o, r in zip(out, ref):
        assert o.shape == (B, ny) and o.dtype == jnp.float32
        assert jnp.allclose(o, r, atol=5e-3, rtol=5e-3), float(jnp.max(jnp.abs(o - r)))

    print("KERNEL_OK")
</pallas_src>

<mosaic_0001>
module attributes {stable_mosaic.version = 11 : i64} {
  func.func @kernel(%arg0: i32, %arg1: i32, %arg2: memref<2x4xf32, #tpu.memory_space<smem>>, %arg3: memref<1x8x128xf32, #tpu.memory_space<vmem>>, %arg4: memref<384x128xbf16, #tpu.memory_space<vmem>>, %arg5: memref<8x128xf32, #tpu.memory_space<vmem>>, %arg6: memref<1x8x128xf32, #tpu.memory_space<vmem>>, %arg7: memref<8x128xbf16, #tpu.memory_space<vmem>>) attributes {dimension_semantics = [#tpu.dimension_semantics<parallel>, #tpu.dimension_semantics<parallel>], iteration_bounds = array<i64: 2, 1>, scalar_prefetch = 1 : i64, scratch_operands = 1 : i64, tpu.core_type = #tpu.core_type<tc>, window_params = [{transform_indices = @transform_0, window_bounds = array<i64: 1, 8, 128>}, {pipeline_mode = #tpu.pipeline_mode<synchronous>, transform_indices = @transform_1, window_bounds = array<i64: 384, 128>}, {pipeline_mode = #tpu.pipeline_mode<synchronous>, transform_indices = @transform_2, window_bounds = array<i64: 8, 128>}, {transform_indices = @transform_3, window_bounds = array<i64: 1, 8, 128>}]} {
    %c0 = arith.constant 0 : index
    %c0_0 = arith.constant 0 : index
    %c0_1 = arith.constant 0 : index
    %0 = vector.load %arg3[%c0, %c0_0, %c0_1] : memref<1x8x128xf32, #tpu.memory_space<vmem>>, vector<1x8x128xf32>
    %1 = vector.shape_cast %0 : vector<1x8x128xf32> to vector<8x128xf32>
    %2 = arith.truncf %1 : vector<8x128xf32> to vector<8x128xbf16>
    %c0_2 = arith.constant 0 : index
    %c0_3 = arith.constant 0 : index
    %3 = vector.load %arg4[%c0_2, %c0_3] : memref<384x128xbf16, #tpu.memory_space<vmem>>, vector<128x128xbf16>
    %cst = arith.constant dense<0.000000e+00> : vector<8x128xf32>
    %4 = tpu.matmul %2, %3, %cst {dimension_numbers = #tpu.dot_dimension_numbers<[1], [0], [0], [1], [0, 0, 1, 1], [], []>} : vector<8x128xbf16>, vector<128x128xbf16>, vector<8x128xf32> -> vector<8x128xf32>
    %c0_4 = arith.constant 0 : index
    %c0_5 = arith.constant 0 : index
    %5 = vector.load %arg5[%c0_4, %c0_5] : memref<8x128xf32, #tpu.memory_space<vmem>>, vector<1x128xf32>
    %6 = vector.broadcast %5 : vector<1x128xf32> to vector<8x128xf32>
    %7 = arith.addf %4, %6 : vector<8x128xf32>
    %c0_6 = arith.constant 0 : index
    %c0_7 = arith.constant 0 : index
    %8 = memref.load %arg2[%c0_6, %c0_7] : memref<2x4xf32, #tpu.memory_space<smem>>
    %c0_8 = arith.constant 0 : index
    %c1 = arith.constant 1 : index
    %9 = memref.load %arg2[%c0_8, %c1] : memref<2x4xf32, #tpu.memory_space<smem>>
    %c0_9 = arith.constant 0 : index
    %c2 = arith.constant 2 : index
    %10 = memref.load %arg2[%c0_9, %c2] : memref<2x4xf32, #tpu.memory_space<smem>>
    %c0_10 = arith.constant 0 : index
    %c3 = arith.constant 3 : index
    %11 = memref.load %arg2[%c0_10, %c3] : memref<2x4xf32, #tpu.memory_space<smem>>
    %cst_11 = arith.constant 0.000000e+00 : f32
    %12 = arith.cmpf ogt, %8, %cst_11 : f32
    %13 = arith.extui %12 : i1 to i32
    %c0_i32 = arith.constant 0 : i32
    %14 = arith.cmpi ne, %13, %c0_i32 : i32
    scf.if %14 {
      %52 = vector.broadcast %8 : f32 to vector<8x128xf32>
      %53 = arith.mulf %52, %7 : vector<8x128xf32>
      %54 = math.exp %53 : vector<8x128xf32>
      %55 = vector.broadcast %9 : f32 to vector<8x128xf32>
      %56 = arith.mulf %54, %55 : vector<8x128xf32>
      %57 = vector.broadcast %10 : f32 to vector<8x128xf32>
      %58 = arith.addf %56, %57 : vector<8x128xf32>
      %59 = arith.truncf %58 : vector<8x128xf32> to vector<8x128xbf16>
      %c0_44 = arith.constant 0 : index
      %c0_45 = arith.constant 0 : index
      %60 = vector.load %arg7[%c0_44, %c0_45] : memref<8x128xbf16, #tpu.memory_space<vmem>>, vector<8x128xbf16>
      tpu.vector_store %arg7[%c0_44, %c0_45], %59 {strides = array<i32>} : memref<8x128xbf16, #tpu.memory_space<vmem>>, vector<8x128xbf16>,
    } else {
    }
    %cst_12 = arith.constant 0.000000e+00 : f32
    %15 = arith.cmpf olt, %8, %cst_12 : f32
    %16 = arith.extui %15 : i1 to i32
    %c0_i32_13 = arith.constant 0 : i32
    %17 = arith.cmpi ne, %16, %c0_i32_13 : i32
    scf.if %17 {
      %52 = vector.broadcast %8 : f32 to vector<8x128xf32>
      %53 = arith.mulf %52, %7 : vector<8x128xf32>
      %54 = vector.broadcast %11 : f32 to vector<8x128xf32>
      %55 = arith.subf %54, %53 : vector<8x128xf32>
      %cst_44 = arith.constant 1.000000e-30 : f32
      %56 = vector.broadcast %cst_44 : f32 to vector<8x128xf32>
      %57 = arith.maximumf %55, %56 : vector<8x128xf32>
      %58 = math.log %57 : vector<8x128xf32>
      %cst_45 = arith.constant 0.000000e+00 : f32
      %59 = vector.broadcast %cst_45 : f32 to vector<8x128xf32>
      %60 = arith.subf %59, %58 : vector<8x128xf32>
      %61 = vector.broadcast %9 : f32 to vector<8x128xf32>
      %62 = arith.mulf %60, %61 : vector<8x128xf32>
      %63 = arith.truncf %62 : vector<8x128xf32> to vector<8x128xbf16>
      %c0_46 = arith.constant 0 : index
      %c0_47 = arith.constant 0 : index
      %64 = vector.load %arg7[%c0_46, %c0_47] : memref<8x128xbf16, #tpu.memory_space<vmem>>, vector<8x128xbf16>
      tpu.vector_store %arg7[%c0_46, %c0_47], %63 {strides = array<i32>} : memref<8x128xbf16, #tpu.memory_space<vmem>>, vector<8x128xbf16>,
    } else {
    }
    %cst_14 = arith.constant 0.000000e+00 : f32
    %18 = arith.cmpf oeq, %8, %cst_14 : f32
    %19 = arith.extui %18 : i1 to i32
    %c0_i32_15 = arith.constant 0 : i32
    %20 = arith.cmpi ne, %19, %c0_i32_15 : i32
    scf.if %20 {
      %52 = arith.truncf %7 : vector<8x128xf32> to vector<8x128xbf16>
      %c0_44 = arith.constant 0 : index
      %c0_45 = arith.constant 0 : index
      %53 = vector.load %arg7[%c0_44, %c0_45] : memref<8x128xbf16, #tpu.memory_space<vmem>>, vector<8x128xbf16>
      tpu.vector_store %arg7[%c0_44, %c0_45], %52 {strides = array<i32>} : memref<8x128xbf16, #tpu.memory_space<vmem>>, vector<8x128xbf16>,
    } else {
    }
    %c0_16 = arith.constant 0 : index
    %c0_17 = arith.constant 0 : index
    %21 = vector.load %arg7[%c0_16, %c0_17] : memref<8x128xbf16, #tpu.memory_space<vmem>>, vector<8x128xbf16>
    %c128 = arith.constant 128 : index
    %c0_18 = arith.constant 0 : index
    %22 = vector.load %arg4[%c128, %c0_18] : memref<384x128xbf16, #tpu.memory_space<vmem>>, vector<128x128xbf16>
    %cst_19 = arith.constant dense<0.000000e+00> : vector<8x128xf32>
    %23 = tpu.matmul %21, %22, %cst_19 {dimension_numbers = #tpu.dot_dimension_numbers<[1], [0], [0], [1], [0, 0, 1, 1], [], []>} : vector<8x128xbf16>, vector<128x128xbf16>, vector<8x128xf32> -> vector<8x128xf32>
    %c1_20 = arith.constant 1 : index
    %c0_21 = arith.constant 0 : index
    %24 = vector.load %arg5[%c1_20, %c0_21] : memref<8x128xf32, #tpu.memory_space<vmem>>, vector<1x128xf32>
    %25 = vector.broadcast %24 : vector<1x128xf32> to vector<8x128xf32>
    %26 = arith.addf %23, %25 : vector<8x128xf32>
    %c1_22 = arith.constant 1 : index
    %c0_23 = arith.constant 0 : index
    %27 = memref.load %arg2[%c1_22, %c0_23] : memref<2x4xf32, #tpu.memory_space<smem>>
    %c1_24 = arith.constant 1 : index
    %c1_25 = arith.constant 1 : index
    %28 = memref.load %arg2[%c1_24, %c1_25] : memref<2x4xf32, #tpu.memory_space<smem>>
    %c1_26 = arith.constant 1 : index
    %c2_27 = arith.constant 2 : index
    %29 = memref.load %arg2[%c1_26, %c2_27] : memref<2x4xf32, #tpu.memory_space<smem>>
    %c1_28 = arith.constant 1 : index
    %c3_29 = arith.constant 3 : index
    %30 = memref.load %arg2[%c1_28, %c3_29] : memref<2x4xf32, #tpu.memory_space<smem>>
    %cst_30 = arith.constant 0.000000e+00 : f32
    %31 = arith.cmpf ogt, %27, %cst_30 : f32
    %32 = arith.extui %31 : i1 to i32
    %c0_i32_31 = arith.constant 0 : i32
    %33 = arith.cmpi ne, %32, %c0_i32_31 : i32
    scf.if %33 {
      %52 = vector.broadcast %27 : f32 to vector<8x128xf32>
      %53 = arith.mulf %52, %26 : vector<8x128xf32>
      %54 = math.exp %53 : vector<8x128xf32>
      %55 = vector.broadcast %28 : f32 to vector<8x128xf32>
      %56 = arith.mulf %54, %55 : vector<8x128xf32>
      %57 = vector.broadcast %29 : f32 to vector<8x128xf32>
      %58 = arith.addf %56, %57 : vector<8x128xf32>
      %59 = arith.truncf %58 : vector<8x128xf32> to vector<8x128xbf16>
      %c0_44 = arith.constant 0 : index
      %c0_45 = arith.constant 0 : index
      %60 = vector.load %arg7[%c0_44, %c0_45] : memref<8x128xbf16, #tpu.memory_space<vmem>>, vector<8x128xbf16>
      tpu.vector_store %arg7[%c0_44, %c0_45], %59 {strides = array<i32>} : memref<8x128xbf16, #tpu.memory_space<vmem>>, vector<8x128xbf16>,
    } else {
    }
    %cst_32 = arith.constant 0.000000e+00 : f32
    %34 = arith.cmpf olt, %27, %cst_32 : f32
    %35 = arith.extui %34 : i1 to i32
    %c0_i32_33 = arith.constant 0 : i32
    %36 = arith.cmpi ne, %35, %c0_i32_33 : i32
    scf.if %36 {
      %52 = vector.broadcast %27 : f32 to vector<8x128xf32>
      %53 = arith.mulf %52, %26 : vector<8x128xf32>
      %54 = vector.broadcast %30 : f32 to vector<8x128xf32>
      %55 = arith.subf %54, %53 : vector<8x128xf32>
      %cst_44 = arith.constant 1.000000e-30 : f32
      %56 = vector.broadcast %cst_44 : f32 to vector<8x128xf32>
      %57 = arith.maximumf %55, %56 : vector<8x128xf32>
      %58 = math.log %57 : vector<8x128xf32>
      %cst_45 = arith.constant 0.000000e+00 : f32
      %59 = vector.broadcast %cst_45 : f32 to vector<8x128xf32>
      %60 = arith.subf %59, %58 : vector<8x128xf32>
      %61 = vector.broadcast %28 : f32 to vector<8x128xf32>
      %62 = arith.mulf %60, %61 : vector<8x128xf32>
      %63 = arith.truncf %62 : vector<8x128xf32> to vector<8x128xbf16>
      %c0_46 = arith.constant 0 : index
      %c0_47 = arith.constant 0 : index
      %64 = vector.load %arg7[%c0_46, %c0_47] : memref<8x128xbf16, #tpu.memory_space<vmem>>, vector<8x128xbf16>
      tpu.vector_store %arg7[%c0_46, %c0_47], %63 {strides = array<i32>} : memref<8x128xbf16, #tpu.memory_space<vmem>>, vector<8x128xbf16>,
    } else {
    }
    %cst_34 = arith.constant 0.000000e+00 : f32
    %37 = arith.cmpf oeq, %27, %cst_34 : f32
    %38 = arith.extui %37 : i1 to i32
    %c0_i32_35 = arith.constant 0 : i32
    %39 = arith.cmpi ne, %38, %c0_i32_35 : i32
    scf.if %39 {
      %52 = arith.truncf %26 : vector<8x128xf32> to vector<8x128xbf16>
      %c0_44 = arith.constant 0 : index
      %c0_45 = arith.constant 0 : index
      %53 = vector.load %arg7[%c0_44, %c0_45] : memref<8x128xbf16, #tpu.memory_space<vmem>>, vector<8x128xbf16>
      tpu.vector_store %arg7[%c0_44, %c0_45], %52 {strides = array<i32>} : memref<8x128xbf16, #tpu.memory_space<vmem>>, vector<8x128xbf16>,
    } else {
    }
    %c0_36 = arith.constant 0 : index
    %c0_37 = arith.constant 0 : index
    %40 = vector.load %arg7[%c0_36, %c0_37] : memref<8x128xbf16, #tpu.memory_space<vmem>>, vector<8x128xbf16>
    %c256 = arith.constant 256 : index
    %c0_38 = arith.constant 0 : index
    %41 = vector.load %arg4[%c256, %c0_38] : memref<384x128xbf16, #tpu.memory_space<vmem>>, vector<128x128xbf16>
    %c2_i32 = arith.constant 2 : i32
    %42 = arith.addi %c2_i32, %arg0 : i32
    %43 = arith.index_cast %42 : i32 to index
    %c0_39 = arith.constant 0 : index
    %44 = vector.load %arg5[%43, %c0_39] : memref<8x128xf32, #tpu.memory_space<vmem>>, vector<1x128xf32>
    %cst_40 = arith.constant dense<0.000000e+00> : vector<8x128xf32>
    %45 = tpu.matmul %40, %41, %cst_40 {dimension_numbers = #tpu.dot_dimension_numbers<[1], [0], [0], [1], [0, 0, 1, 1], [], []>} : vector<8x128xbf16>, vector<128x128xbf16>, vector<8x128xf32> -> vector<8x128xf32>
    %46 = vector.broadcast %44 : vector<1x128xf32> to vector<8x128xf32>
    %47 = arith.addf %45, %46 : vector<8x128xf32>
    %48 = arith.addf %1, %47 : vector<8x128xf32>
    %c0_41 = arith.constant 0 : index
    %c0_42 = arith.constant 0 : index
    %c0_43 = arith.constant 0 : index
    %49 = vector.load %arg6[%c0_41, %c0_42, %c0_43] : memref<1x8x128xf32, #tpu.memory_space<vmem>>, vector<1x8x128xf32>
    %50 = vector.shape_cast %49 : vector<1x8x128xf32> to vector<8x128xf32>
    %51 = vector.shape_cast %48 : vector<8x128xf32> to vector<1x8x128xf32>
    tpu.vector_store %arg6[%c0_41, %c0_42, %c0_43], %51 {strides = array<i32>} : memref<1x8x128xf32, #tpu.memory_space<vmem>>, vector<1x8x128xf32>,
    return
  }
  func.func @transform_0(%arg0: i32, %arg1: i32, %arg2: memref<2x4xf32, #tpu.memory_space<smem>>) -> (i32, i32, i32) {
    %c0_i32 = arith.constant 0 : i32
    %c0_i32_0 = arith.constant 0 : i32
    return %arg0, %arg1, %c0_i32 : i32, i32, i32
  }
  func.func @transform_1(%arg0: i32, %arg1: i32, %arg2: memref<2x4xf32, #tpu.memory_space<smem>>) -> (i32, i32) {
    %c0_i32 = arith.constant 0 : i32
    %c0_i32_0 = arith.constant 0 : i32
    %c0_i32_1 = arith.constant 0 : i32
    return %c0_i32, %c0_i32_0 : i32, i32
  }
  func.func @transform_2(%arg0: i32, %arg1: i32, %arg2: memref<2x4xf32, #tpu.memory_space<smem>>) -> (i32, i32) {
    %c0_i32 = arith.constant 0 : i32
    %c0_i32_0 = arith.constant 0 : i32
    %c0_i32_1 = arith.constant 0 : i32
    return %c0_i32, %c0_i32_0 : i32, i32
  }
  func.func @transform_3(%arg0: i32, %arg1: i32, %arg2: memref<2x4xf32, #tpu.memory_space<smem>>) -> (i32, i32, i32) {
    %c0_i32 = arith.constant 0 : i32
    %c0_i32_0 = arith.constant 0 : i32
    return %arg0, %arg1, %c0_i32 : i32, i32, i32
  }
}

</mosaic_0001>

<llo_original>
// kernel: tpu_custom_call.1
$region0: #{tpu_custom_call.1}
  #allocation0 [shape = 'u32[]', space=smem, size = 0x4, offset = 0x4, fixed_abs, tag = 'smem constant byte address 0x4 - core index']
  #allocation1 [shape = 'u32[144,128]{1,0:T(1,128)}', space=vmem, size = 0x12000, scoped, tag = 'internal scratch']
  #allocation2 [shape = 'bf16[8,128]{1,0:T(8,128)(2,1)}', space=vmem, size = 0x800, scoped, tag = 'scratch operand']
  #allocation3 [shape = 's32[1]{0}', space=sflag, size = 0x4, scoped, tag = 'scoped memory for tpu_custom_call.1']
  #allocation4 [shape = 'u8[1024]{0}', space=smem, size = 0x400, scoped, tag = 'prefetched SMEM operand 0']
  %s0 = inlined_call_operand.hbm [shape: f32[2,4], index: 0, kind: input, shape index: {}]
  %s1 = inlined_call_operand.hbm [shape: f32[2,8,128], index: 1, kind: input, shape index: {}]
  %s2 = inlined_call_operand.hbm [shape: bf16[384,128], index: 2, kind: input, shape index: {}]
  %s3 = inlined_call_operand.vmem [shape: f32[8,128], index: 3, kind: input, shape index: {}]
  %s4 = inlined_call_operand.hbm [shape: f32[2,8,128], index: 4, kind: output, shape index: {}]
  %s5 = sld [smem:[#allocation0]]
  $region77: #{tpu_custom_call.1} parent=0
    _
  %s7 = ssub.s32 1, %s5
  %s8 = scalar_select 0, %s7, %s5
  %10 = dma.hbm_to_smem %s0, 32, [#allocation4], [#allocation3]
  %11 = dma.done [#allocation3], 32
  %12 = sfence
  $region1: #{tpu_custom_call.1} parent=0
    #allocation5 [shape = 'u8[8192]{0}', space=vmem, size = 0x2000, scoped, tag = 'input window, operand 1']
    #allocation6 [shape = 's32[2]{0}', space=sflag, size = 0x8, scoped, tag = 'scoped memory for tpu_custom_call.1']
    #allocation7 [shape = 's32[2]{0}', space=sflag, size = 0x8, scoped, tag = 'scoped memory for tpu_custom_call.1']
    #allocation8 [shape = 'u8[98304]{0}', space=vmem, size = 0x18000, scoped, tag = 'input window, operand 2, single buffered']
    #allocation9 [shape = 's32[1]{0}', space=sflag, size = 0x4, scoped, tag = 'scoped memory for tpu_custom_call.1']
    #allocation10 [shape = 'u8[8192]{0}', space=vmem, size = 0x2000, scoped, tag = 'output window, operand 0']
    %13 = vsyncpa [#allocation6], 0
    %s14 = scalar_lea.sflag [#allocation6], 1
    %15 = vsyncpa %s14, 0
    %16 = vsyncpa [#allocation9], 0
    %17 = vsyncpa [#allocation7], 0
    %s18 = scalar_lea.sflag [#allocation7], 1
    %19 = vsyncpa %s18, 0
    loop: start=0, step=1, limit=4
    $region2: #{tpu_custom_call.1} parent=1 // loop_pre_header
      _
    $region3: #{tpu_custom_call.1} parent=1 // loop_header
      %s21 = sphi 0, %s25
      %p22 = scmp.ge.s32.totalorder %s21, 4
      %s28 = sphi 0, %s40
      %s29 = sphi 0, %s36
      %s30 = sphi 0, %s28
      %s31 = sphi 0, %s29
      %s32 = sphi 0, %s30
      %s33 = sphi 0, %s31
      %s45 = sphi 0, %s47
      %s48 = sphi 0, %s45
      %s49 = sphi 0, %s48
      %s65 = sphi 0, %s49
      %s69 = sphi 0, %s69
      %s71 = sphi 0, %s69
      %s72 = sphi 0, %s71
      %s86 = sphi 0, %s72
      %s90 = sphi 0, %s90
      %s92 = sphi 0, %s90
      %s93 = sphi 0, %s92
      %s107 = sphi 0, %s93
      %s115 = sphi 0, %s117
      %s118 = sphi 0, %s115
      %s119 = sphi 0, %s118
      %s135 = sphi 0, %s119
    $region4: #{tpu_custom_call.1} parent=1 // loop_header_branch
      %24 = sbr.rel (%p22) target = $region8
    $region5: #{tpu_custom_call.1} parent=1 // loop_body
      %s26 = ssub.s32 %s21, 1
      %s27 = ssub.s32 %s21, 2
      %s34 = sadd.s32 1, %s29
      %p35 = scmp.ge.s32.totalorder %s34, 1
      %s36 = scalar_select %p35, 0, %s34
      %s37 = sadd.s32 1, %s28
      %s38 = scalar_select %p35, %s37, %s28
      %p39 = scmp.ge.s32.totalorder %s38, 2
      %s40 = scalar_select %p39, 0, %s38
      %s41 = ssub.s32 %s28, %s40
      %s42 = ssub.s32 %s29, %s36
      %s43 = sor.u32 %s41, %s42
      %p44 = scmp.eq.s32.totalorder %s43, 0
      %s46 = sadd.s32 %s45, 1
      %s47 = scalar_select %p44, %s45, %s46
      %p50 = pneg %p44
      %p51 = scmp.eq.s32.totalorder %s21, 1
      %p52 = por %p50, %p51
      %p53 = scmp.ne.s32.totalorder %s45, %s48
      %p54 = scmp.eq.s32.totalorder %s21, 0
      %p55 = por %p53, %p54
      %p56 = scmp.ne.s32.totalorder %s45, %s48
      %p57 = scmp.eq.s32.totalorder %s26, 1
      %p58 = por %p56, %p57
      %p59 = scmp.ne.s32.totalorder %s48, %s49
      %p60 = scmp.eq.s32.totalorder %s26, 0
      %p61 = por %p59, %p60
      %p62 = scmp.ne.s32.totalorder %s48, %s49
      %p63 = scmp.eq.s32.totalorder %s27, 1
      %p64 = por %p62, %p63
      %p66 = scmp.ne.s32.totalorder %s49, %s65
      %p67 = scmp.eq.s32.totalorder %s27, 0
      %p68 = por %p66, %p67
      %s70 = sadd.s32 %s69, 1
      %p73 = scmp.eq.s32.totalorder %s21, 1
      %p74 = scmp.ne.s32.totalorder %s69, %s71
      %p75 = scmp.eq.s32.totalorder %s21, 0
      %p76 = por %p74, %p75
      %p77 = scmp.ne.s32.totalorder %s69, %s71
      %p78 = scmp.eq.s32.totalorder %s26, 1
      %p79 = por %p77, %p78
      %p80 = scmp.ne.s32.totalorder %s71, %s72
      %p81 = scmp.eq.s32.totalorder %s26, 0
      %p82 = por %p80, %p81
      %p83 = scmp.ne.s32.totalorder %s71, %s72
      %p84 = scmp.eq.s32.totalorder %s27, 1
      %p85 = por %p83, %p84
      %p87 = scmp.ne.s32.totalorder %s72, %s86
      %p88 = scmp.eq.s32.totalorder %s27, 0
      %p89 = por %p87, %p88
      %s91 = sadd.s32 %s90, 1
      %p94 = scmp.eq.s32.totalorder %s21, 1
      %p95 = scmp.ne.s32.totalorder %s90, %s92
      %p96 = scmp.eq.s32.totalorder %s21, 0
      %p97 = por %p95, %p96
      %p98 = scmp.ne.s32.totalorder %s90, %s92
      %p99 = scmp.eq.s32.totalorder %s26, 1
      %p100 = por %p98, %p99
      %p101 = scmp.ne.s32.totalorder %s92, %s93
      %p102 = scmp.eq.s32.totalorder %s26, 0
      %p103 = por %p101, %p102
      %p104 = scmp.ne.s32.totalorder %s92, %s93
      %p105 = scmp.eq.s32.totalorder %s27, 1
      %p106 = por %p104, %p105
      %p108 = scmp.ne.s32.totalorder %s93, %s107
      %p109 = scmp.eq.s32.totalorder %s27, 0
      %p110 = por %p108, %p109
      %s111 = ssub.s32 %s28, %s40
      %s112 = ssub.s32 %s29, %s36
      %s113 = sor.u32 %s111, %s112
      %p114 = scmp.eq.s32.totalorder %s113, 0
      %s116 = sadd.s32 %s115, 1
      %s117 = scalar_select %p114, %s115, %s116
      %p120 = pneg %p114
      %p121 = scmp.eq.s32.totalorder %s21, 1
      %p122 = por %p120, %p121
      %p123 = scmp.ne.s32.totalorder %s115, %s118
      %p124 = scmp.eq.s32.totalorder %s21, 0
      %p125 = por %p123, %p124
      %p126 = scmp.ne.s32.totalorder %s115, %s118
      %p127 = scmp.eq.s32.totalorder %s26, 1
      %p128 = por %p126, %p127
      %p129 = scmp.ne.s32.totalorder %s118, %s119
      %p130 = scmp.eq.s32.totalorder %s26, 0
      %p131 = por %p129, %p130
      %p132 = scmp.ne.s32.totalorder %s118, %s119
      %p133 = scmp.eq.s32.totalorder %s27, 1
      %p134 = por %p132, %p133
      %p136 = scmp.ne.s32.totalorder %s119, %s135
      %p137 = scmp.eq.s32.totalorder %s27, 0
      %p138 = por %p136, %p137
      %p139 = scmp.le.s32.totalorder 1, %s21
      %p140 = scmp.lt.s32.totalorder %s21, 3
      %p141 = pnand %p139, %p140
      %p142 = pneg %p141
      // Predicated region
      $region9: #{tpu_custom_call.1} parent=5 // pred_check
        _
      $region10: #{tpu_custom_call.1} parent=5 // pred_check_branch
        %144 = sbr.rel (%p141) target = $region12
      $region11: #{tpu_custom_call.1} parent=5 // pred_region
        %s145 = ssub.s32 %s21, 1
        // Predicated region
        $region13: #{tpu_custom_call.1} parent=11 // pred_check
          %p146 = pneg %p82
        $region14: #{tpu_custom_call.1} parent=11 // pred_check_branch
          %148 = sbr.rel (%p146) target = $region16
        $region15: #{tpu_custom_call.1} parent=11 // pred_region
          %s150 = ssub.s32 3072, 3072
          %151 = vsyncadd [#allocation9], %s150
          %s152 = sshll.u32 [#allocation8], 4
          %s153 = int_to_ptr.vmem [resolvable:$true] %s152
          %158 = dma.hbm_to_vmem [thread:$0]  %s2, 3072, %s153, [#allocation9], 64, 64, 4
        $region16: #{tpu_custom_call.1} parent=11 // pred_fallthru
          _
        // Predicated region
        $region17: #{tpu_custom_call.1} parent=11 // pred_check
          %p159 = pneg %p103
        $region18: #{tpu_custom_call.1} parent=11 // pred_check_branch
          %161 = sbr.rel (%p159) target = $region20
        $region19: #{tpu_custom_call.1} parent=11 // pred_region
          _
        $region20: #{tpu_custom_call.1} parent=11 // pred_fallthru
          _
      $region12: #{tpu_custom_call.1} parent=5 // pred_fallthru
        _
      %p162 = scmp.lt.s32.totalorder %s21, 2
      // Predicated region
      $region21: #{tpu_custom_call.1} parent=5 // pred_check
        %p163 = pneg %p162
      $region22: #{tpu_custom_call.1} parent=5 // pred_check_branch
        %165 = sbr.rel (%p163) target = $region24
      $region23: #{tpu_custom_call.1} parent=5 // pred_region
        // Predicated region
        $region25: #{tpu_custom_call.1} parent=23 // pred_check
          %p166 = pneg %p55
        $region26: #{tpu_custom_call.1} parent=23 // pred_check_branch
          %168 = sbr.rel (%p166) target = $region28
        $region27: #{tpu_custom_call.1} parent=23 // pred_region
          %s169 = sand.u32 %s45, 1
          %s170 = scalar_lea.sflag [#allocation6], %s169
          %s171 = sand.u32 %s45, 1
          %s172 = smul.addr %s171, 8
          %s173 = scalar_lea.vmem [#allocation5], %s172
          %s175 = ssub.s32 128, 128
          %176 = vsyncadd %s170, %s175
          %s177 = sadd.s32 %s29, %s28
          %s178 = smul.addr %s177, 128
          %s179 = scalar_lea.hbm %s1, %s178
          %s181 = sshll.u32 %s173, 4
          %s182 = int_to_ptr.vmem [resolvable:$true] %s181
          %184 = dma.hbm_to_vmem [thread:$0]  %s179, 128, %s182, %s170
        $region28: #{tpu_custom_call.1} parent=23 // pred_fallthru
          _
      $region24: #{tpu_custom_call.1} parent=5 // pred_fallthru
        _
      %p185 = scmp.le.s32.totalorder 1, %s21
      %p186 = scmp.lt.s32.totalorder %s21, 3
      %p187 = pnand %p185, %p186
      %p188 = pneg %p187
      // Predicated region
      $region29: #{tpu_custom_call.1} parent=5 // pred_check
        _
      $region30: #{tpu_custom_call.1} parent=5 // pred_check_branch
        %190 = sbr.rel (%p187) target = $region32
      $region31: #{tpu_custom_call.1} parent=5 // pred_region
        %s191 = ssub.s32 %s21, 1
        %s192 = sand.u32 %s48, 1
        %s193 = scalar_lea.sflag [#allocation6], %s192
        %s194 = sand.u32 %s48, 1
        %s195 = smul.addr %s194, 8
        %s196 = scalar_lea.vmem [#allocation5], %s195
        // Predicated region
        $region33: #{tpu_custom_call.1} parent=31 // pred_check
          %p197 = pneg %p61
        $region34: #{tpu_custom_call.1} parent=31 // pred_check_branch
          %199 = sbr.rel (%p197) target = $region36
        $region35: #{tpu_custom_call.1} parent=31 // pred_region
          %200 = dma.done %s193, 128
        $region36: #{tpu_custom_call.1} parent=31 // pred_fallthru
          _
        // Predicated region
        $region37: #{tpu_custom_call.1} parent=31 // pred_check
          %p201 = pneg %p82
        $region38: #{tpu_custom_call.1} parent=31 // pred_check_branch
          %203 = sbr.rel (%p201) target = $region40
        $region39: #{tpu_custom_call.1} parent=31 // pred_region
          %204 = dma.done [#allocation9], 3072
        $region40: #{tpu_custom_call.1} parent=31 // pred_fallthru
          _
        %s205 = sand.u32 %s48, 1
        %s206 = scalar_lea.sflag [#allocation6], %s205
        %s207 = sand.u32 %s48, 1
        %s208 = smul.addr %s207, 8
        %s209 = scalar_lea.vmem [#allocation5], %s208
        %p210 = pneg %p61
        %p211 = pneg %p58
        %p212 = pneg %p82
        %p213 = pneg %p79
        %p214 = pneg %p103
        %p215 = pneg %p100
        %p216 = pneg %p131
        %p217 = pneg %p128
        %s218 = sand.u32 %s118, 1
        %s219 = scalar_lea.sflag [#allocation7], %s218
        %s220 = sand.u32 %s118, 1
        %s221 = smul.addr %s220, 8
        %s222 = scalar_lea.vmem [#allocation10], %s221
        %v224 = vld [vmem:[%s196] sm:$0xff]
        %v225 = vpack.c.bf16 %v224, %v224
        %v226 = vld [vmem:[#allocation8] sm:$0xf]
        %v227 = vld [vmem:[#allocation8 + $0x4] sm:$0xf]
        %v228 = vld [vmem:[#allocation8 + $0x8] sm:$0xf]
        %v229 = vld [vmem:[#allocation8 + $0xc] sm:$0xf]
        %v230 = vld [vmem:[#allocation8 + $0x10] sm:$0xf]
        %v231 = vld [vmem:[#allocation8 + $0x14] sm:$0xf]
        %v232 = vld [vmem:[#allocation8 + $0x18] sm:$0xf]
        %v233 = vld [vmem:[#allocation8 + $0x1c] sm:$0xf]
        %v234 = vld [vmem:[#allocation8 + $0x20] sm:$0xf]
        %v235 = vld [vmem:[#allocation8 + $0x24] sm:$0xf]
        %v236 = vld [vmem:[#allocation8 + $0x28] sm:$0xf]
        %v237 = vld [vmem:[#allocation8 + $0x2c] sm:$0xf]
        %v238 = vld [vmem:[#allocation8 + $0x30] sm:$0xf]
        %v239 = vld [vmem:[#allocation8 + $0x34] sm:$0xf]
        %v240 = vld [vmem:[#allocation8 + $0x38] sm:$0xf]
        %v241 = vld [vmem:[#allocation8 + $0x3c] sm:$0xf]
        %v242 = vld [vmem:[%s3] sm:$0x1]
        %v243 = vlaneseq
        %v244 = vshrl.u32 %v243, 7
        %v245 = vsub.s32 0, %v244
        %v246 = vrot.slane %v242, %v245
        %v263 = vunpack.c.l.b16 %v226
        %v264 = vunpack.c.l.b16 %v227
        %v265 = vunpack.c.l.b16 %v228
        %v266 = vunpack.c.l.b16 %v229
        %v267 = vunpack.c.l.b16 %v230
        %v268 = vunpack.c.l.b16 %v231
        %v269 = vunpack.c.l.b16 %v232
        %v270 = vunpack.c.l.b16 %v233
        %v271 = vunpack.c.l.b16 %v234
        %v272 = vunpack.c.l.b16 %v235
        %v273 = vunpack.c.l.b16 %v236
        %v274 = vunpack.c.l.b16 %v237
        %v275 = vunpack.c.l.b16 %v238
        %v276 = vunpack.c.l.b16 %v239
        %v277 = vunpack.c.l.b16 %v240
        %v278 = vunpack.c.l.b16 %v241
        %v279 = vpack.c.b16 %v264, %v263
        %v280 = vpack.c.b16 %v266, %v265
        %v281 = vpack.c.b16 %v268, %v267
        %v282 = vpack.c.b16 %v270, %v269
        %v283 = vpack.c.b16 %v272, %v271
        %v284 = vpack.c.b16 %v274, %v273
        %v285 = vpack.c.b16 %v276, %v275
        %v286 = vpack.c.b16 %v278, %v277
        %295 = vmatprep.subr.bf16.mxu0 0
        %296 = vmatpush1.bf16.msra.mxu0 %v279
        %297 = vmatprep.subr.bf16.mxu0 0
        %298 = vmatpush1.bf16.msra.mxu0 %v280
        %299 = vmatprep.subr.bf16.mxu0 0
        %300 = vmatpush1.bf16.msra.mxu0 %v281
        %301 = vmatprep.subr.bf16.mxu0 0
        %302 = vmatpush1.bf16.msra.mxu0 %v282
        %303 = vmatprep.subr.bf16.mxu0 0
        %304 = vmatpush1.bf16.msra.mxu0 %v283
        %305 = vmatprep.subr.bf16.mxu0 0
        %306 = vmatpush1.bf16.msra.mxu0 %v284
        %307 = vmatprep.subr.bf16.mxu0 0
        %308 = vmatpush1.bf16.msra.mxu0 %v285
        %309 = vmatprep.subr.bf16.mxu0 0
        %310 = vmatpush1.bf16.msra.mxu0 %v286
        %311 = vmatprep.subr.bf16.mxu0 0
        %312 = vmatpush1.bf16.msra.mxu0 0
        %313 = vmatprep.subr.bf16.mxu0 0
        %314 = vmatpush1.bf16.msra.mxu0 0
        %315 = vmatprep.subr.bf16.mxu0 0
        %316 = vmatpush1.bf16.msra.mxu0 0
        %317 = vmatprep.subr.bf16.mxu0 0
        %318 = vmatpush1.bf16.msra.mxu0 0
        %319 = vmatprep.subr.bf16.mxu0 0
        %320 = vmatpush1.bf16.msra.mxu0 0
        %321 = vmatprep.subr.bf16.mxu0 0
        %322 = vmatpush1.bf16.msra.mxu0 0
        %323 = vmatprep.subr.bf16.mxu0 0
        %324 = vmatpush1.bf16.msra.mxu0 0
        %325 = vmatprep.subr.bf16.mxu0 0
        %326 = vmatpush1.bf16.msra.mxu0 0
        %327 = vmatprep.mubr.bf16.mxu0 0
        %328 = vmatmul.mubr.bf16.gmra.mrb[0].mxu0 %v225
        %v329 = vpop.f32.mrb[0].mxu0
        %v330 = vadd.f32 %v246, %v329
        %v331 = vpop.f32.mrb[0].mxu0
        %v332 = vpop.f32.mrb[0].mxu0
        %v333 = vpop.f32.mrb[0].mxu0
        %334 = vdwg.mxu0
        %s335 = sld [smem:[#allocation4]]
        %s336 = sld [smem:[#allocation4 + $0x1]]
        %s337 = sld [smem:[#allocation4 + $0x2]]
        %s338 = sld [smem:[#allocation4 + $0x3]]
        %p339 = scmp.gt.f32.partialorder %s335, 0.0
        // Predicated region
        $region41: #{tpu_custom_call.1} parent=31 // pred_check
          %p340 = pneg %p339
        $region42: #{tpu_custom_call.1} parent=31 // pred_check_branch
          %342 = sbr.rel (%p340) target = $region44
        $region43: #{tpu_custom_call.1} parent=31 // pred_region
          %v343 = vstv %s335
          %v344 = vmul.f32 %v343, %v330
          %v345 = vmul.f32 %v344, 1.442695
          %v346 = vpow.pop %v345
          %v347 = vstv %s336
          %v348 = vmul.f32 %v346, %v347
          %v349 = vstv %s337
          %v350 = vadd.f32 %v348, %v349
          %v351 = vpack.c.bf16 %v350, %v350
          %352 = vst [vmem:[#allocation2] sm:$0xf] %v351
        $region44: #{tpu_custom_call.1} parent=31 // pred_fallthru
          _
        %p353 = scmp.lt.f32.partialorder %s335, 0.0
        // Predicated region
        $region45: #{tpu_custom_call.1} parent=31 // pred_check
          %p354 = pneg %p353
        $region46: #{tpu_custom_call.1} parent=31 // pred_check_branch
          %356 = sbr.rel (%p354) target = $region48
        $region47: #{tpu_custom_call.1} parent=31 // pred_region
          %v357 = vstv %s335
          %v358 = vmul.f32 %v357, %v330
          %v359 = vstv %s338
          %v360 = vsub.f32 %v359, %v358
          %v361 = vmax.f32 %v360, 1e-30
          %v362 = vlog2.pop %v361
          %v363 = vmul.f32 %v362, 0.6931472
          %v364 = vsub.f32 0.0, %v363
          %v365 = vstv %s336
          %v366 = vmul.f32 %v364, %v365
          %v367 = vpack.c.bf16 %v366, %v366
          %368 = vst [vmem:[#allocation2] sm:$0xf] %v367
        $region48: #{tpu_custom_call.1} parent=31 // pred_fallthru
          _
        %p369 = scmp.eq.f32.partialorder %s335, 0.0
        // Predicated region
        $region49: #{tpu_custom_call.1} parent=31 // pred_check
          %p370 = pneg %p369
        $region50: #{tpu_custom_call.1} parent=31 // pred_check_branch
          %372 = sbr.rel (%p370) target = $region52
        $region51: #{tpu_custom_call.1} parent=31 // pred_region
          %v373 = vpack.c.bf16 %v330, %v330
          %374 = vst [vmem:[#allocation2] sm:$0xf] %v373
        $region52: #{tpu_custom_call.1} parent=31 // pred_fallthru
          _
        %v375 = vld [vmem:[#allocation2] sm:$0xf]
        %v376 = vld [vmem:[#allocation8 + $0x40] sm:$0xf]
        %v377 = vld [vmem:[#allocation8 + $0x44] sm:$0xf]
        %v378 = vld [vmem:[#allocation8 + $0x48] sm:$0xf]
        %v379 = vld [vmem:[#allocation8 + $0x4c] sm:$0xf]
        %v380 = vld [vmem:[#allocation8 + $0x50] sm:$0xf]
        %v381 = vld [vmem:[#allocation8 + $0x54] sm:$0xf]
        %v382 = vld [vmem:[#allocation8 + $0x58] sm:$0xf]
        %v383 = vld [vmem:[#allocation8 + $0x5c] sm:$0xf]
        %v384 = vld [vmem:[#allocation8 + $0x60] sm:$0xf]
        %v385 = vld [vmem:[#allocation8 + $0x64] sm:$0xf]
        %v386 = vld [vmem:[#allocation8 + $0x68] sm:$0xf]
        %v387 = vld [vmem:[#allocation8 + $0x6c] sm:$0xf]
        %v388 = vld [vmem:[#allocation8 + $0x70] sm:$0xf]
        %v389 = vld [vmem:[#allocation8 + $0x74] sm:$0xf]
        %v390 = vld [vmem:[#allocation8 + $0x78] sm:$0xf]
        %v391 = vld [vmem:[#allocation8 + $0x7c] sm:$0xf]
        %v392 = vld [vmem:[%s3 + $0x1] sm:$0x1]
        %v393 = vlaneseq
        %v394 = vshrl.u32 %v393, 7
        %v395 = vsub.s32 0, %v394
        %v396 = vrot.slane %v392, %v395
        %v413 = vunpack.c.l.b16 %v376
        %v414 = vunpack.c.l.b16 %v377
        %v415 = vunpack.c.l.b16 %v378
        %v416 = vunpack.c.l.b16 %v379
        %v417 = vunpack.c.l.b16 %v380
        %v418 = vunpack.c.l.b16 %v381
        %v419 = vunpack.c.l.b16 %v382
        %v420 = vunpack.c.l.b16 %v383
        %v421 = vunpack.c.l.b16 %v384
        %v422 = vunpack.c.l.b16 %v385
        %v423 = vunpack.c.l.b16 %v386
        %v424 = vunpack.c.l.b16 %v387
        %v425 = vunpack.c.l.b16 %v388
        %v426 = vunpack.c.l.b16 %v389
        %v427 = vunpack.c.l.b16 %v390
        %v428 = vunpack.c.l.b16 %v391
        %v429 = vpack.c.b16 %v414, %v413
        %v430 = vpack.c.b16 %v416, %v415
        %v431 = vpack.c.b16 %v418, %v417
        %v432 = vpack.c.b16 %v420, %v419
        %v433 = vpack.c.b16 %v422, %v421
        %v434 = vpack.c.b16 %v424, %v423
        %v435 = vpack.c.b16 %v426, %v425
        %v436 = vpack.c.b16 %v428, %v427
        %445 = vmatprep.subr.bf16.mxu0 0
        %446 = vmatpush1.bf16.msra.mxu0 %v429
        %447 = vmatprep.subr.bf16.mxu0 0
        %448 = vmatpush1.bf16.msra.mxu0 %v430
        %449 = vmatprep.subr.bf16.mxu0 0
        %450 = vmatpush1.bf16.msra.mxu0 %v431
        %451 = vmatprep.subr.bf16.mxu0 0
        %452 = vmatpush1.bf16.msra.mxu0 %v432
        %453 = vmatprep.subr.bf16.mxu0 0
        %454 = vmatpush1.bf16.msra.mxu0 %v433
        %455 = vmatprep.subr.bf16.mxu0 0
        %456 = vmatpush1.bf16.msra.mxu0 %v434
        %457 = vmatprep.subr.bf16.mxu0 0
        %458 = vmatpush1.bf16.msra.mxu0 %v435
        %459 = vmatprep.subr.bf16.mxu0 0
        %460 = vmatpush1.bf16.msra.mxu0 %v436
        %461 = vmatprep.subr.bf16.mxu0 0
        %462 = vmatpush1.bf16.msra.mxu0 0
        %463 = vmatprep.subr.bf16.mxu0 0
        %464 = vmatpush1.bf16.msra.mxu0 0
        %465 = vmatprep.subr.bf16.mxu0 0
        %466 = vmatpush1.bf16.msra.mxu0 0
        %467 = vmatprep.subr.bf16.mxu0 0
        %468 = vmatpush1.bf16.msra.mxu0 0
        %469 = vmatprep.subr.bf16.mxu0 0
        %470 = vmatpush1.bf16.msra.mxu0 0
        %471 = vmatprep.subr.bf16.mxu0 0
        %472 = vmatpush1.bf16.msra.mxu0 0
        %473 = vmatprep.subr.bf16.mxu0 0
        %474 = vmatpush1.bf16.msra.mxu0 0
        %475 = vmatprep.subr.bf16.mxu0 0
        %476 = vmatpush1.bf16.msra.mxu0 0
        %477 = vmatprep.mubr.bf16.mxu0 0
        %478 = vmatmul.mubr.bf16.gmra.mrb[0].mxu0 %v375
        %v479 = vpop.f32.mrb[0].mxu0
        %v480 = vadd.f32 %v396, %v479
        %v481 = vpop.f32.mrb[0].mxu0
        %v482 = vpop.f32.mrb[0].mxu0
        %v483 = vpop.f32.mrb[0].mxu0
        %484 = vdwg.mxu0
        %s485 = sld [smem:[#allocation4 + $0x80]]
        %s486 = sld [smem:[#allocation4 + $0x81]]
        %s487 = sld [smem:[#allocation4 + $0x82]]
        %s488 = sld [smem:[#allocation4 + $0x83]]
        %p489 = scmp.gt.f32.partialorder %s485, 0.0
        // Predicated region
        $region53: #{tpu_custom_call.1} parent=31 // pred_check
          %p490 = pneg %p489
        $region54: #{tpu_custom_call.1} parent=31 // pred_check_branch
          %492 = sbr.rel (%p490) target = $region56
        $region55: #{tpu_custom_call.1} parent=31 // pred_region
          %v493 = vstv %s485
          %v494 = vmul.f32 %v493, %v480
          %v495 = vmul.f32 %v494, 1.442695
          %v496 = vpow.pop %v495
          %v497 = vstv %s486
          %v498 = vmul.f32 %v496, %v497
          %v499 = vstv %s487
          %v500 = vadd.f32 %v498, %v499
          %v501 = vpack.c.bf16 %v500, %v500
          %502 = vst [vmem:[#allocation2] sm:$0xf] %v501
        $region56: #{tpu_custom_call.1} parent=31 // pred_fallthru
          _
        %p503 = scmp.lt.f32.partialorder %s485, 0.0
        // Predicated region
        $region57: #{tpu_custom_call.1} parent=31 // pred_check
          %p504 = pneg %p503
        $region58: #{tpu_custom_call.1} parent=31 // pred_check_branch
          %506 = sbr.rel (%p504) target = $region60
        $region59: #{tpu_custom_call.1} parent=31 // pred_region
          %v507 = vstv %s485
          %v508 = vmul.f32 %v507, %v480
          %v509 = vstv %s488
          %v510 = vsub.f32 %v509, %v508
          %v511 = vmax.f32 %v510, 1e-30
          %v512 = vlog2.pop %v511
          %v513 = vmul.f32 %v512, 0.6931472
          %v514 = vsub.f32 0.0, %v513
          %v515 = vstv %s486
          %v516 = vmul.f32 %v514, %v515
          %v517 = vpack.c.bf16 %v516, %v516
          %518 = vst [vmem:[#allocation2] sm:$0xf] %v517
        $region60: #{tpu_custom_call.1} parent=31 // pred_fallthru
          _
        %p519 = scmp.eq.f32.partialorder %s485, 0.0
        // Predicated region
        $region61: #{tpu_custom_call.1} parent=31 // pred_check
          %p520 = pneg %p519
        $region62: #{tpu_custom_call.1} parent=31 // pred_check_branch
          %522 = sbr.rel (%p520) target = $region64
        $region63: #{tpu_custom_call.1} parent=31 // pred_region
          %v523 = vpack.c.bf16 %v480, %v480
          %524 = vst [vmem:[#allocation2] sm:$0xf] %v523
        $region64: #{tpu_custom_call.1} parent=31 // pred_fallthru
          _
        %v525 = vld [vmem:[#allocation2] sm:$0xf]
        %v526 = vld [vmem:[#allocation8 + $0x80] sm:$0xf]
        %v527 = vld [vmem:[#allocation8 + $0x84] sm:$0xf]
        %v528 = vld [vmem:[#allocation8 + $0x88] sm:$0xf]
        %v529 = vld [vmem:[#allocation8 + $0x8c] sm:$0xf]
        %v530 = vld [vmem:[#allocation8 + $0x90] sm:$0xf]
        %v531 = vld [vmem:[#allocation8 + $0x94] sm:$0xf]
        %v532 = vld [vmem:[#allocation8 + $0x98] sm:$0xf]
        %v533 = vld [vmem:[#allocation8 + $0x9c] sm:$0xf]
        %v534 = vld [vmem:[#allocation8 + $0xa0] sm:$0xf]
        %v535 = vld [vmem:[#allocation8 + $0xa4] sm:$0xf]
        %v536 = vld [vmem:[#allocation8 + $0xa8] sm:$0xf]
        %v537 = vld [vmem:[#allocation8 + $0xac] sm:$0xf]
        %v538 = vld [vmem:[#allocation8 + $0xb0] sm:$0xf]
        %v539 = vld [vmem:[#allocation8 + $0xb4] sm:$0xf]
        %v540 = vld [vmem:[#allocation8 + $0xb8] sm:$0xf]
        %v541 = vld [vmem:[#allocation8 + $0xbc] sm:$0xf]
        %s542 = sadd.s32 %s30, 2
        %s543 = scalar_lea.vmem %s3, %s542
        %v544 = vld [vmem:[%s543] sm:$0x1]
        %v545 = vlaneseq
        %v546 = vshrl.u32 %v545, 7
        %v547 = vsub.s32 0, %v546
        %v548 = vrot.slane %v544, %v547
        %v565 = vunpack.c.l.b16 %v526
        %v566 = vunpack.c.l.b16 %v527
        %v567 = vunpack.c.l.b16 %v528
        %v568 = vunpack.c.l.b16 %v529
        %v569 = vunpack.c.l.b16 %v530
        %v570 = vunpack.c.l.b16 %v531
        %v571 = vunpack.c.l.b16 %v532
        %v572 = vunpack.c.l.b16 %v533
        %v573 = vunpack.c.l.b16 %v534
        %v574 = vunpack.c.l.b16 %v535
        %v575 = vunpack.c.l.b16 %v536
        %v576 = vunpack.c.l.b16 %v537
        %v577 = vunpack.c.l.b16 %v538
        %v578 = vunpack.c.l.b16 %v539
        %v579 = vunpack.c.l.b16 %v540
        %v580 = vunpack.c.l.b16 %v541
        %v581 = vpack.c.b16 %v566, %v565
        %v582 = vpack.c.b16 %v568, %v567
        %v583 = vpack.c.b16 %v570, %v569
        %v584 = vpack.c.b16 %v572, %v571
        %v585 = vpack.c.b16 %v574, %v573
        %v586 = vpack.c.b16 %v576, %v575
        %v587 = vpack.c.b16 %v578, %v577
        %v588 = vpack.c.b16 %v580, %v579
        %597 = vmatprep.subr.bf16.mxu0 0
        %598 = vmatpush1.bf16.msra.mxu0 %v581
        %599 = vmatprep.subr.bf16.mxu0 0
        %600 = vmatpush1.bf16.msra.mxu0 %v582
        %601 = vmatprep.subr.bf16.mxu0 0
        %602 = vmatpush1.bf16.msra.mxu0 %v583
        %603 = vmatprep.subr.bf16.mxu0 0
        %604 = vmatpush1.bf16.msra.mxu0 %v584
        %605 = vmatprep.subr.bf16.mxu0 0
        %606 = vmatpush1.bf16.msra.mxu0 %v585
        %607 = vmatprep.subr.bf16.mxu0 0
        %608 = vmatpush1.bf16.msra.mxu0 %v586
        %609 = vmatprep.subr.bf16.mxu0 0
        %610 = vmatpush1.bf16.msra.mxu0 %v587
        %611 = vmatprep.subr.bf16.mxu0 0
        %612 = vmatpush1.bf16.msra.mxu0 %v588
        %613 = vmatprep.subr.bf16.mxu0 0
        %614 = vmatpush1.bf16.msra.mxu0 0
        %615 = vmatprep.subr.bf16.mxu0 0
        %616 = vmatpush1.bf16.msra.mxu0 0
        %617 = vmatprep.subr.bf16.mxu0 0
        %618 = vmatpush1.bf16.msra.mxu0 0
        %619 = vmatprep.subr.bf16.mxu0 0
        %620 = vmatpush1.bf16.msra.mxu0 0
        %621 = vmatprep.subr.bf16.mxu0 0
        %622 = vmatpush1.bf16.msra.mxu0 0
        %623 = vmatprep.subr.bf16.mxu0 0
        %624 = vmatpush1.bf16.msra.mxu0 0
        %625 = vmatprep.subr.bf16.mxu0 0
        %626 = vmatpush1.bf16.msra.mxu0 0
        %627 = vmatprep.subr.bf16.mxu0 0
        %628 = vmatpush1.bf16.msra.mxu0 0
        %629 = vmatprep.mubr.bf16.mxu0 0
        %630 = vmatmul.mubr.bf16.gmra.mrb[0].mxu0 %v525
        %v631 = vpop.f32.mrb[0].mxu0
        %v632 = vadd.f32 %v548, %v631
        %v633 = vpop.f32.mrb[0].mxu0
        %v634 = vpop.f32.mrb[0].mxu0
        %v635 = vpop.f32.mrb[0].mxu0
        %636 = vdwg.mxu0
        %v637 = vadd.f32 %v224, %v632
        %638 = vst [vmem:[%s222] sm:$0xff] %v637
        %s639 = sand.u32 %s118, 1
        %s640 = scalar_lea.sflag [#allocation7], %s639
        %s641 = sand.u32 %s118, 1
        %s642 = smul.addr %s641, 8
        %s643 = scalar_lea.vmem [#allocation10], %s642
        // Predicated region
        $region65: #{tpu_custom_call.1} parent=31 // pred_check
          %p644 = pneg %p128
        $region66: #{tpu_custom_call.1} parent=31 // pred_check_branch
          %646 = sbr.rel (%p644) target = $region68
        $region67: #{tpu_custom_call.1} parent=31 // pred_region
          %s648 = ssub.s32 128, 128
          %649 = vsyncadd %s640, %s648
          %s650 = sadd.s32 %s31, %s30
          %s651 = smul.addr %s650, 128
          %s652 = scalar_lea.hbm %s4, %s651
          %s654 = sshll.u32 %s643, 4
          %s655 = int_to_ptr.vmem [resolvable:$true] %s654
          %657 = dma.vmem_to_hbm [thread:$0]  %s655, 128, %s652, %s640
        $region68: #{tpu_custom_call.1} parent=31 // pred_fallthru
          _
      $region32: #{tpu_custom_call.1} parent=5 // pred_fallthru
        _
      %p658 = scmp.le.s32.totalorder 2, %s21
      // Predicated region
      $region69: #{tpu_custom_call.1} parent=5 // pred_check
        %p659 = pneg %p658
      $region70: #{tpu_custom_call.1} parent=5 // pred_check_branch
        %661 = sbr.rel (%p659) target = $region72
      $region71: #{tpu_custom_call.1} parent=5 // pred_region
        %s662 = ssub.s32 %s21, 2
        // Predicated region
        $region73: #{tpu_custom_call.1} parent=71 // pred_check
          %p663 = pneg %p134
        $region74: #{tpu_custom_call.1} parent=71 // pred_check_branch
          %665 = sbr.rel (%p663) target = $region76
        $region75: #{tpu_custom_call.1} parent=71 // pred_region
          %s666 = sand.u32 %s119, 1
          %s667 = scalar_lea.sflag [#allocation7], %s666
          %s668 = sand.u32 %s119, 1
          %s669 = smul.addr %s668, 8
          %s670 = scalar_lea.vmem [#allocation10], %s669
          %671 = dma.done %s667, 128
        $region76: #{tpu_custom_call.1} parent=71 // pred_fallthru
          _
      $region72: #{tpu_custom_call.1} parent=5 // pred_fallthru
        _
    $region6: #{tpu_custom_call.1} parent=1 // loop_footer
      %s25 = sadd.s32 1, %s21
    $region7: #{tpu_custom_call.1} parent=1 // loop_footer_branch
      %20 = sbr.rel target = $region3
    $region8: #{tpu_custom_call.1} parent=1 // loop_exit
      _
    %672 = vsyncpa [#allocation6], 1
    %s673 = scalar_lea.sflag [#allocation6], 1
    %674 = vsyncpa %s673, 1
    %675 = vsyncpa [#allocation9], 1
    %676 = vsyncpa [#allocation7], 1
    %s677 = scalar_lea.sflag [#allocation7], 1
    %678 = vsyncpa %s677, 1

</llo_original>
